<compile_context>
chip_gen: v5e
topology: v5e:2x2
jax: 0.10.0
libtpu: 0.0.40
codegen_flags: <defaults>
</compile_context>

<pallas_src>
import jax
import jax.numpy as jnp
from jax.experimental import pallas as pl
from jax.experimental.pallas import tpu as pltpu

_SQRT_2_OVER_PI = 0.7978845608028654


def _cdiv(a, b):
    return (a + b - 1) // b


def _round_up(a, b):
    return _cdiv(a, b) * b


def mlp_kernel(x_ref, wfc_ref, bfc_ref, wproj_ref, bproj_ref, o_ref, acc_ref):
    """One (row-tile, hidden-panel) step of the fused MLP.

    x_ref:     (TM, C)   input row tile, native dtype (cast to bf16 in-kernel)
    wfc_ref:   (C, TH)   c_fc weight panel, bf16
    bfc_ref:   (1, TH)   c_fc bias panel, f32
    wproj_ref: (TH, C)   c_proj weight panel, bf16
    bproj_ref: (1, C)    c_proj bias, f32 (grid-invariant)
    o_ref:     (TM, C)   output tile (written only on the last hidden panel)
    acc_ref:   (TM, C)   f32 accumulator scratch
    """
    h_idx = pl.program_id(1)

    @pl.when(h_idx == 0)
    def _init():
        acc_ref[...] = jnp.zeros_like(acc_ref)

    # bf16 MXU operand, cast in-kernel (saves a wrapper-side HBM pass over x).
    x = x_ref[...].astype(wfc_ref.dtype)

    # c_fc panel: (TM, C) @ (C, TH), f32 accumulation on the MXU, per-panel bias.
    h = jnp.dot(x, wfc_ref[...], preferred_element_type=jnp.float32) + bfc_ref[...]

    # GELU, tanh approximation (matches nn.GELU(approximate='tanh')), f32 math
    # (VPU muls + EUP tanh overlap under the MXU; also correct for v5e).
    g = 0.5 * h * (1.0 + jnp.tanh(_SQRT_2_OVER_PI * (h + 0.044715 * (h * h * h))))

    # c_proj panel: (TM, TH) @ (TH, C), accumulated in f32.
    acc_ref[...] += jnp.dot(g.astype(wproj_ref.dtype), wproj_ref[...],
                            preferred_element_type=jnp.float32)

    @pl.when(h_idx == pl.num_programs(1) - 1)
    def _finalize():
        # c_proj bias added exactly once, then store in the output dtype.
        o_ref[...] = (acc_ref[...] + bproj_ref[...]).astype(o_ref.dtype)


def _device_config():
    """Returns (row_tile, hidden_panel_target, vmem_limit_bytes, is_v7x)."""
    try:
        kind = jax.devices()[0].device_kind.lower()
    except Exception:
        kind = ""
    if "v7" in kind:
        # 64 MiB VMEM per TensorCore, 2 TCs/chip: smaller row tiles, even grid.
        return 256, 1536, 48 * 1024 * 1024, True
    if "v6" in kind or "v5" in kind:
        # 128 MiB VMEM: big row tiles amortize the ~0.35us/step overhead.
        # v5e's default scoped-VMEM (16 MiB) is too small -> explicit limit.
        return 512, 2048, 100 * 1024 * 1024, False
    return 256, 2048, None, False


def _pick_hidden_panel(H, target):
    """Largest multiple of 128 that divides H and is <= target (else H)."""
    if H <= target or H % 128 != 0:
        return H
    th = (target // 128) * 128
    while th >= 128:
        if H % th == 0:
            return th
        th -= 128
    return H


def prepare_mlp_params(w_fc, b_fc, w_proj, b_proj):
    """One-time parameter prep: hoists the bf16 weight cast out of the forward."""
    H = w_fc.shape[1]
    C = w_proj.shape[1]
    return (w_fc.astype(jnp.bfloat16),
            b_fc.reshape(1, H).astype(jnp.float32),
            w_proj.astype(jnp.bfloat16),
            b_proj.reshape(1, C).astype(jnp.float32))


def mlp_forward(x, w_fc, b_fc, w_proj, b_proj, *, out_dtype=None, tm=None, th=None):
    """Fused c_fc -> GELU(tanh) -> c_proj.  x: (B, T, C) -> (B, T, C)."""
    B, T, C = x.shape
    H = w_fc.shape[1]            # 4 * C
    M = B * T
    out_dtype = x.dtype if out_dtype is None else out_dtype

    # Accept either raw f32 params or pre-cast params from prepare_mlp_params
    # (pre-casting once avoids a per-call HBM re-read/re-write of the weights).
    w_fc_c = w_fc if w_fc.dtype == jnp.bfloat16 else w_fc.astype(jnp.bfloat16)
    w_proj_c = w_proj if w_proj.dtype == jnp.bfloat16 else w_proj.astype(jnp.bfloat16)
    b_fc2 = b_fc.reshape(1, H).astype(jnp.float32)
    b_proj2 = b_proj.reshape(1, C).astype(jnp.float32)

    # No wrapper-side cast / pad / slice: kernel casts, Pallas masks ragged tiles.
    x2d = x.reshape(M, C)

    tm_dev, th_target, vmem_limit, is_v7x = _device_config()
    tm = tm_dev if tm is None else tm
    tm_eff = _round_up(min(tm, max(M, 1)), 16)
    n_m = _cdiv(M, tm_eff)
    if is_v7x and n_m > 1 and n_m % 2 == 1:
        # Even M-tile count so the "parallel" axis splits evenly across 2 TCs.
        tm_eff = _round_up(_cdiv(M, n_m + 1), 16)
        n_m = _cdiv(M, tm_eff)

    th_eff = _pick_hidden_panel(H, th_target) if th is None else th
    # The hidden axis must not be ragged (garbage panels would pollute the acc).
    assert H % th_eff == 0, "hidden panel size must divide 4*n_embd"
    n_h = _cdiv(H, th_eff)

    grid = (n_m, n_h)

    in_specs = [
        pl.BlockSpec((tm_eff, C), lambda i, h: (i, 0)),    # x row tile (reused over h)
        pl.BlockSpec((C, th_eff), lambda i, h: (0, h)),    # c_fc weight panel (streamed)
        pl.BlockSpec((1, th_eff), lambda i, h: (0, h)),    # c_fc bias panel
        pl.BlockSpec((th_eff, C), lambda i, h: (h, 0)),    # c_proj weight panel (streamed)
        pl.BlockSpec((1, C), lambda i, h: (0, 0)),         # c_proj bias (grid-invariant)
    ]
    out_specs = pl.BlockSpec((tm_eff, C), lambda i, h: (i, 0))

    w_bytes = 2 * C * H * 2  # both bf16 weight matrices, re-fetched per row tile
    cost = pl.CostEstimate(
        flops=4 * M * C * H,                       # two matmuls
        transcendentals=M * H,                     # tanh
        bytes_accessed=(M * C * x.dtype.itemsize   # x in
                        + n_m * w_bytes            # streamed weights
                        + (H + C) * 4              # biases
                        + M * C * jnp.dtype(out_dtype).itemsize),  # out
    )

    cp_kwargs = dict(dimension_semantics=("parallel", "arbitrary"))
    if vmem_limit is not None:
        cp_kwargs["vmem_limit_bytes"] = vmem_limit

    out2d = pl.pallas_call(
        mlp_kernel,
        out_shape=jax.ShapeDtypeStruct((M, C), out_dtype),
        grid_spec=pltpu.PrefetchScalarGridSpec(
            num_scalar_prefetch=0,
            grid=grid,
            in_specs=in_specs,
            out_specs=out_specs,
            scratch_shapes=[pltpu.VMEM((tm_eff, C), jnp.float32)],
        ),
        compiler_params=pltpu.CompilerParams(**cp_kwargs),
        cost_estimate=cost,
    )(x2d, w_fc_c, b_fc2, w_proj_c, b_proj2)

    return out2d.reshape(B, T, C)


def reference_mlp(x, w_fc, b_fc, w_proj, b_proj, compute_dtype=jnp.float32):
    """Pure-JAX reference. compute_dtype=bfloat16 mirrors the kernel's MXU path."""
    xc = x.astype(compute_dtype)
    h = jnp.einsum("btc,ch->bth", xc, w_fc.astype(compute_dtype),
                   preferred_element_type=jnp.float32) + b_fc
    g = 0.5 * h * (1.0 + jnp.tanh(_SQRT_2_OVER_PI * (h + 0.044715 * h ** 3)))
    out = jnp.einsum("bth,hc->btc", g.astype(compute_dtype),
                     w_proj.astype(compute_dtype),
                     preferred_element_type=jnp.float32) + b_proj
    return out.astype(x.dtype)


if __name__ == "__main__":
    # Small GPT-2-like config: n_embd=32 -> hidden 128, batch=2, seq=8.
    B, T, C = 2, 8, 32
    H = 4 * C

    key = jax.random.PRNGKey(0)
    kx, k1, k2, k3, k4 = jax.random.split(key, 5)

    x = jax.random.normal(kx, (B, T, C), dtype=jnp.float32)
    # Deterministic synthetic params (shapes mirror nn.Linear in the module,
    # stored as (in_features, out_features)).
    w_fc = jax.random.normal(k1, (C, H), dtype=jnp.float32) * 0.02
    b_fc = jax.random.normal(k2, (H,), dtype=jnp.float32) * 0.01
    w_proj = jax.random.normal(k3, (H, C), dtype=jnp.float32) * 0.02
    b_proj = jax.random.normal(k4, (C,), dtype=jnp.float32) * 0.01

    # Hoisted one-time bf16 weight cast (done once, reused every call).
    params = prepare_mlp_params(w_fc, b_fc, w_proj, b_proj)

    out = jax.block_until_ready(mlp_forward(x, *params))
    assert out.shape == (B, T, C)

    # Tight check vs a reference that mirrors bf16-operand / f32-accumulate math.
    ref_bf16 = reference_mlp(x, w_fc, b_fc, w_proj, b_proj,
                             compute_dtype=jnp.bfloat16)
    assert jnp.allclose(out, ref_bf16, atol=1e-2, rtol=1e-2), \
        "mismatch vs bf16 reference"

    # Loose sanity check vs the full-f32 reference (difference = bf16 rounding).
    ref_f32 = reference_mlp(x, w_fc, b_fc, w_proj, b_proj,
                            compute_dtype=jnp.float32)
    assert jnp.allclose(out, ref_f32, atol=5e-2, rtol=5e-2), \
        "mismatch vs f32 reference"

    print("KERNEL_OK")
</pallas_src>

<mosaic_0001>
module attributes {stable_mosaic.version = 11 : i64} {
  func.func @mlp_kernel(%arg0: i32, %arg1: i32, %arg2: memref<16x32xf32, #tpu.memory_space<vmem>>, %arg3: memref<32x128xbf16, #tpu.memory_space<vmem>>, %arg4: memref<1x128xf32, #tpu.memory_space<vmem>>, %arg5: memref<128x32xbf16, #tpu.memory_space<vmem>>, %arg6: memref<1x32xf32, #tpu.memory_space<vmem>>, %arg7: memref<16x32xf32, #tpu.memory_space<vmem>>, %arg8: memref<16x32xf32, #tpu.memory_space<vmem>>) attributes {dimension_semantics = [#tpu.dimension_semantics<parallel>, #tpu.dimension_semantics<arbitrary>], iteration_bounds = array<i64: 1, 1>, scalar_prefetch = 0 : i64, scratch_operands = 1 : i64, tpu.core_type = #tpu.core_type<tc>, window_params = [{transform_indices = @transform_0, window_bounds = array<i64: 16, 32>}, {transform_indices = @transform_1, window_bounds = array<i64: 32, 128>}, {transform_indices = @transform_2, window_bounds = array<i64: 1, 128>}, {transform_indices = @transform_3, window_bounds = array<i64: 128, 32>}, {pipeline_mode = #tpu.pipeline_mode<synchronous>, transform_indices = @transform_4, window_bounds = array<i64: 1, 32>}, {transform_indices = @transform_5, window_bounds = array<i64: 16, 32>}]} {
    %c0_i32 = arith.constant 0 : i32
    %0 = arith.cmpi eq, %arg1, %c0_i32 : i32
    %1 = arith.extui %0 : i1 to i32
    %c0_i32_0 = arith.constant 0 : i32
    %2 = arith.cmpi ne, %1, %c0_i32_0 : i32
    scf.if %2 {
      %cst_19 = arith.constant 0.000000e+00 : f32
      %32 = vector.broadcast %cst_19 : f32 to vector<16x32xf32>
      %c0_20 = arith.constant 0 : index
      %c0_21 = arith.constant 0 : index
      %33 = vector.load %arg8[%c0_20, %c0_21] : memref<16x32xf32, #tpu.memory_space<vmem>>, vector<16x32xf32>
      tpu.vector_store %arg8[%c0_20, %c0_21], %32 {strides = array<i32>} : memref<16x32xf32, #tpu.memory_space<vmem>>, vector<16x32xf32>,
    } else {
    }
    %c0 = arith.constant 0 : index
    %c0_1 = arith.constant 0 : index
    %3 = vector.load %arg2[%c0, %c0_1] : memref<16x32xf32, #tpu.memory_space<vmem>>, vector<16x32xf32>
    %4 = arith.truncf %3 : vector<16x32xf32> to vector<16x32xbf16>
    %c0_2 = arith.constant 0 : index
    %c0_3 = arith.constant 0 : index
    %5 = vector.load %arg3[%c0_2, %c0_3] : memref<32x128xbf16, #tpu.memory_space<vmem>>, vector<32x128xbf16>
    %cst = arith.constant dense<0.000000e+00> : vector<16x128xf32>
    %6 = tpu.matmul %4, %5, %cst {dimension_numbers = #tpu.dot_dimension_numbers<[1], [0], [0], [1], [0, 0, 1, 1], [], []>} : vector<16x32xbf16>, vector<32x128xbf16>, vector<16x128xf32> -> vector<16x128xf32>
    %c0_4 = arith.constant 0 : index
    %c0_5 = arith.constant 0 : index
    %7 = vector.load %arg4[%c0_4, %c0_5] : memref<1x128xf32, #tpu.memory_space<vmem>>, vector<1x128xf32>
    %8 = vector.broadcast %7 : vector<1x128xf32> to vector<16x128xf32>
    %9 = arith.addf %6, %8 : vector<16x128xf32>
    %cst_6 = arith.constant 5.000000e-01 : f32
    %10 = vector.broadcast %cst_6 : f32 to vector<16x128xf32>
    %11 = arith.mulf %10, %9 : vector<16x128xf32>
    %12 = arith.mulf %9, %9 : vector<16x128xf32>
    %13 = arith.mulf %12, %9 : vector<16x128xf32>
    %cst_7 = arith.constant 4.471500e-02 : f32
    %14 = vector.broadcast %cst_7 : f32 to vector<16x128xf32>
    %15 = arith.mulf %14, %13 : vector<16x128xf32>
    %16 = arith.addf %9, %15 : vector<16x128xf32>
    %cst_8 = arith.constant 0.797884583 : f32
    %17 = vector.broadcast %cst_8 : f32 to vector<16x128xf32>
    %18 = arith.mulf %17, %16 : vector<16x128xf32>
    %19 = math.tanh %18 : vector<16x128xf32>
    %cst_9 = arith.constant 1.000000e+00 : f32
    %20 = vector.broadcast %cst_9 : f32 to vector<16x128xf32>
    %21 = arith.addf %20, %19 : vector<16x128xf32>
    %22 = arith.mulf %11, %21 : vector<16x128xf32>
    %c0_10 = arith.constant 0 : index
    %c0_11 = arith.constant 0 : index
    %23 = vector.load %arg8[%c0_10, %c0_11] : memref<16x32xf32, #tpu.memory_space<vmem>>, vector<16x32xf32>
    %24 = arith.truncf %22 : vector<16x128xf32> to vector<16x128xbf16>
    %c0_12 = arith.constant 0 : index
    %c0_13 = arith.constant 0 : index
    %25 = vector.load %arg5[%c0_12, %c0_13] : memref<128x32xbf16, #tpu.memory_space<vmem>>, vector<128x32xbf16>
    %cst_14 = arith.constant dense<0.000000e+00> : vector<16x32xf32>
    %26 = tpu.matmul %24, %25, %cst_14 {dimension_numbers = #tpu.dot_dimension_numbers<[1], [0], [0], [1], [0, 0, 1, 1], [], []>} : vector<16x128xbf16>, vector<128x32xbf16>, vector<16x32xf32> -> vector<16x32xf32>
    %27 = arith.addf %23, %26 : vector<16x32xf32>
    %c0_15 = arith.constant 0 : index
    %c0_16 = arith.constant 0 : index
    %28 = vector.load %arg8[%c0_15, %c0_16] : memref<16x32xf32, #tpu.memory_space<vmem>>, vector<16x32xf32>
    tpu.vector_store %arg8[%c0_15, %c0_16], %27 {strides = array<i32>} : memref<16x32xf32, #tpu.memory_space<vmem>>, vector<16x32xf32>,
    %c0_i32_17 = arith.constant 0 : i32
    %29 = arith.cmpi eq, %arg1, %c0_i32_17 : i32
    %30 = arith.extui %29 : i1 to i32
    %c0_i32_18 = arith.constant 0 : i32
    %31 = arith.cmpi ne, %30, %c0_i32_18 : i32
    scf.if %31 {
      %c0_19 = arith.constant 0 : index
      %c0_20 = arith.constant 0 : index
      %32 = vector.load %arg8[%c0_19, %c0_20] : memref<16x32xf32, #tpu.memory_space<vmem>>, vector<16x32xf32>
      %c0_21 = arith.constant 0 : index
      %c0_22 = arith.constant 0 : index
      %33 = vector.load %arg6[%c0_21, %c0_22] : memref<1x32xf32, #tpu.memory_space<vmem>>, vector<1x32xf32>
      %34 = vector.broadcast %33 : vector<1x32xf32> to vector<16x32xf32>
      %35 = arith.addf %32, %34 : vector<16x32xf32>
      %c0_23 = arith.constant 0 : index
      %c0_24 = arith.constant 0 : index
      %36 = vector.load %arg7[%c0_23, %c0_24] : memref<16x32xf32, #tpu.memory_space<vmem>>, vector<16x32xf32>
      tpu.vector_store %arg7[%c0_23, %c0_24], %35 {strides = array<i32>} : memref<16x32xf32, #tpu.memory_space<vmem>>, vector<16x32xf32>,
    } else {
    }
    return
  }
  func.func @transform_0(%arg0: i32, %arg1: i32) -> (i32, i32) {
    %c0_i32 = arith.constant 0 : i32
    %c0_i32_0 = arith.constant 0 : i32
    return %arg0, %c0_i32 : i32, i32
  }
  func.func @transform_1(%arg0: i32, %arg1: i32) -> (i32, i32) {
    %c0_i32 = arith.constant 0 : i32
    %c0_i32_0 = arith.constant 0 : i32
    return %c0_i32, %arg1 : i32, i32
  }
  func.func @transform_2(%arg0: i32, %arg1: i32) -> (i32, i32) {
    %c0_i32 = arith.constant 0 : i32
    %c0_i32_0 = arith.constant 0 : i32
    return %c0_i32, %arg1 : i32, i32
  }
  func.func @transform_3(%arg0: i32, %arg1: i32) -> (i32, i32) {
    %c0_i32 = arith.constant 0 : i32
    %c0_i32_0 = arith.constant 0 : i32
    return %arg1, %c0_i32 : i32, i32
  }
  func.func @transform_4(%arg0: i32, %arg1: i32) -> (i32, i32) {
    %c0_i32 = arith.constant 0 : i32
    %c0_i32_0 = arith.constant 0 : i32
    %c0_i32_1 = arith.constant 0 : i32
    return %c0_i32, %c0_i32_0 : i32, i32
  }
  func.func @transform_5(%arg0: i32, %arg1: i32) -> (i32, i32) {
    %c0_i32 = arith.constant 0 : i32
    %c0_i32_0 = arith.constant 0 : i32
    return %arg0, %c0_i32 : i32, i32
  }
}

</mosaic_0001>

<llo_original>
// kernel: tpu_custom_call.1
$region0: #{tpu_custom_call.1}
  #allocation0 [shape = 'u32[]', space=smem, size = 0x4, offset = 0x4, fixed_abs, tag = 'smem constant byte address 0x4 - core index']
  #allocation1 [shape = 'u32[72,128]{1,0:T(1,128)}', space=vmem, size = 0x9000, scoped, tag = 'internal scratch']
  #allocation2 [shape = 'f32[16,32]{1,0:T(8,128)}', space=vmem, size = 0x2000, scoped, tag = 'scratch operand']
  %s0 = inlined_call_operand.vmem [shape: f32[16,32], index: 0, kind: input, shape index: {}]
  %s1 = inlined_call_operand.vmem [shape: bf16[32,128], index: 1, kind: input, shape index: {}]
  %s2 = inlined_call_operand.vmem [shape: f32[1,128], index: 2, kind: input, shape index: {}]
  %s3 = inlined_call_operand.vmem [shape: bf16[128,32], index: 3, kind: input, shape index: {}]
  %s4 = inlined_call_operand.vmem [shape: f32[1,32], index: 4, kind: input, shape index: {}]
  %s5 = inlined_call_operand.hbm [shape: f32[16,32], index: 5, kind: output, shape index: {}]
  %s6 = sld [smem:[#allocation0]]
  $region38: #{tpu_custom_call.1} parent=0
    _
  %s8 = ssub.s32 1, %s6
  %s9 = scalar_select 0, %s8, %s6
  $region1: #{tpu_custom_call.1} parent=0
    #allocation3 [shape = 'u8[8192]{0}', space=vmem, size = 0x2000, scoped, tag = 'output window, operand 0, single buffered']
    #allocation4 [shape = 's32[1]{0}', space=sflag, size = 0x4, scoped, tag = 'scoped memory for tpu_custom_call.1']
    %10 = vsyncpa [#allocation4], 0
    // Predicated region
    $region2: #{tpu_custom_call.1} parent=1 // pred_check
      _
    $region3: #{tpu_custom_call.1} parent=1 // pred_check_branch
      %12 = sbr.rel (0) target = $region5
    $region4: #{tpu_custom_call.1} parent=1 // pred_region
      _
    $region5: #{tpu_custom_call.1} parent=1 // pred_fallthru
      _
    // Predicated region
    $region6: #{tpu_custom_call.1} parent=1 // pred_check
      _
    $region7: #{tpu_custom_call.1} parent=1 // pred_check_branch
      %14 = sbr.rel (0) target = $region9
    $region8: #{tpu_custom_call.1} parent=1 // pred_region
      _
    $region9: #{tpu_custom_call.1} parent=1 // pred_fallthru
      _
    // Predicated region
    $region10: #{tpu_custom_call.1} parent=1 // pred_check
      _
    $region11: #{tpu_custom_call.1} parent=1 // pred_check_branch
      %16 = sbr.rel (0) target = $region13
    $region12: #{tpu_custom_call.1} parent=1 // pred_region
      _
    $region13: #{tpu_custom_call.1} parent=1 // pred_fallthru
      _
    // Predicated region
    $region14: #{tpu_custom_call.1} parent=1 // pred_check
      _
    $region15: #{tpu_custom_call.1} parent=1 // pred_check_branch
      %18 = sbr.rel (0) target = $region17
    $region16: #{tpu_custom_call.1} parent=1 // pred_region
      _
    $region17: #{tpu_custom_call.1} parent=1 // pred_fallthru
      _
    // Predicated region
    $region18: #{tpu_custom_call.1} parent=1 // pred_check
      _
    $region19: #{tpu_custom_call.1} parent=1 // pred_check_branch
      %20 = sbr.rel (0) target = $region21
    $region20: #{tpu_custom_call.1} parent=1 // pred_region
      _
    $region21: #{tpu_custom_call.1} parent=1 // pred_fallthru
      _
    %p22 = scmp.eq.s32.totalorder 0, 0
    // Predicated region
    $region22: #{tpu_custom_call.1} parent=1 // pred_check
      %p23 = pneg %p22
    $region23: #{tpu_custom_call.1} parent=1 // pred_check_branch
      %25 = sbr.rel (%p23) target = $region25
    $region24: #{tpu_custom_call.1} parent=1 // pred_region
      %vm26 = vcmask 261120
      %27 = vst.msk [vmem:[#allocation2] sm:$0xff] %vm26, 0.0
      %28 = vst.msk [vmem:[#allocation2 + $0x8] sm:$0xff] %vm26, 0.0
    $region25: #{tpu_custom_call.1} parent=1 // pred_fallthru
      _
    %v29 = vld [vmem:[%s0] sm:$0xff]
    %v30 = vld [vmem:[%s0 + $0x8] sm:$0xff]
    %v31 = vpack.c.bf16 %v30, %v29
    %v32 = vld [vmem:[%s1] sm:$0xf]
    %v33 = vld [vmem:[%s1 + $0x4] sm:$0xf]
    %v34 = vld [vmem:[%s1 + $0x8] sm:$0xf]
    %v35 = vld [vmem:[%s1 + $0xc] sm:$0xf]
    %v36 = vld [vmem:[%s2] sm:$0x1]
    %v38 = vperm.slane %v36, 0
    %v44 = vunpack.c.l.b16 %v32
    %v45 = vunpack.c.l.b16 %v33
    %v46 = vunpack.c.l.b16 %v34
    %v47 = vunpack.c.l.b16 %v35
    %v48 = vpack.c.b16 %v45, %v44
    %v49 = vpack.c.b16 %v47, %v46
    %vm52 = vcmask 261120
    %v54 = vsel %vm52, %v31, 0
    %56 = vmatpush.bf16.msra.mxu0 0
    %57 = vmatpush.bf16.msra.mxu0 0
    %58 = vmatpush.bf16.msra.mxu0 0
    %59 = vmatpush.bf16.msra.mxu0 0
    %60 = vmatpush.bf16.msra.mxu0 0
    %61 = vmatpush.bf16.msra.mxu0 0
    %62 = vmatpush.bf16.msra.mxu0 %v49
    %63 = vmatpush.bf16.msra.mxu0 %v48
    %64 = vmatmul.bf16.gmra.mxu0 %v54
    %v65 = vpop.f32.mrf.mxu0
    %v66 = vadd.f32 %v38, %v65
    %v67 = vpop.f32.mrf.mxu0
    %v68 = vadd.f32 %v38, %v67
    %69 = vdwg.mxu0
    %v70 = vmul.f32 %v66, 0.5
    %v71 = vmul.f32 %v68, 0.5
    %v72 = vmul.f32 %v66, %v66
    %v73 = vmul.f32 %v68, %v68
    %v74 = vmul.f32 %v72, %v66
    %v75 = vmul.f32 %v73, %v68
    %v76 = vmul.f32 %v74, 0.044715
    %v77 = vmul.f32 %v75, 0.044715
    %v78 = vadd.f32 %v66, %v76
    %v79 = vadd.f32 %v68, %v77
    %v80 = vmul.f32 %v78, 0.7978846
    %v81 = vmul.f32 %v79, 0.7978846
    %v82 = vtanh.pop %v80
    %v83 = vtanh.pop %v81
    %v84 = vadd.f32 %v82, 1.0
    %v85 = vadd.f32 %v83, 1.0
    %v86 = vmul.f32 %v70, %v84
    %v87 = vmul.f32 %v71, %v85
    %v88 = vld [vmem:[#allocation2] sm:$0xff]
    %v89 = vld [vmem:[#allocation2 + $0x8] sm:$0xff]
    %v90 = vpack.c.bf16 %v87, %v86
    %v91 = vld [vmem:[%s3] sm:$0xf]
    %v92 = vld [vmem:[%s3 + $0x4] sm:$0xf]
    %v93 = vld [vmem:[%s3 + $0x8] sm:$0xf]
    %v94 = vld [vmem:[%s3 + $0xc] sm:$0xf]
    %v95 = vld [vmem:[%s3 + $0x10] sm:$0xf]
    %v96 = vld [vmem:[%s3 + $0x14] sm:$0xf]
    %v97 = vld [vmem:[%s3 + $0x18] sm:$0xf]
    %v98 = vld [vmem:[%s3 + $0x1c] sm:$0xf]
    %v99 = vld [vmem:[%s3 + $0x20] sm:$0xf]
    %v100 = vld [vmem:[%s3 + $0x24] sm:$0xf]
    %v101 = vld [vmem:[%s3 + $0x28] sm:$0xf]
    %v102 = vld [vmem:[%s3 + $0x2c] sm:$0xf]
    %v103 = vld [vmem:[%s3 + $0x30] sm:$0xf]
    %v104 = vld [vmem:[%s3 + $0x34] sm:$0xf]
    %v105 = vld [vmem:[%s3 + $0x38] sm:$0xf]
    %v106 = vld [vmem:[%s3 + $0x3c] sm:$0xf]
    %v123 = vunpack.c.l.b16 %v91
    %v124 = vunpack.c.l.b16 %v92
    %v125 = vunpack.c.l.b16 %v93
    %v126 = vunpack.c.l.b16 %v94
    %v127 = vunpack.c.l.b16 %v95
    %v128 = vunpack.c.l.b16 %v96
    %v129 = vunpack.c.l.b16 %v97
    %v130 = vunpack.c.l.b16 %v98
    %v131 = vunpack.c.l.b16 %v99
    %v132 = vunpack.c.l.b16 %v100
    %v133 = vunpack.c.l.b16 %v101
    %v134 = vunpack.c.l.b16 %v102
    %v135 = vunpack.c.l.b16 %v103
    %v136 = vunpack.c.l.b16 %v104
    %v137 = vunpack.c.l.b16 %v105
    %v138 = vunpack.c.l.b16 %v106
    %v139 = vpack.c.b16 %v124, %v123
    %v140 = vpack.c.b16 %v126, %v125
    %v141 = vpack.c.b16 %v128, %v127
    %v142 = vpack.c.b16 %v130, %v129
    %v143 = vpack.c.b16 %v132, %v131
    %v144 = vpack.c.b16 %v134, %v133
    %v145 = vpack.c.b16 %v136, %v135
    %v146 = vpack.c.b16 %v138, %v137
    %155 = vmatpush.bf16.msra.mxu0 %v146
    %156 = vmatpush.bf16.msra.mxu0 %v145
    %157 = vmatpush.bf16.msra.mxu0 %v144
    %158 = vmatpush.bf16.msra.mxu0 %v143
    %159 = vmatpush.bf16.msra.mxu0 %v142
    %160 = vmatpush.bf16.msra.mxu0 %v141
    %161 = vmatpush.bf16.msra.mxu0 %v140
    %162 = vmatpush.bf16.msra.mxu0 %v139
    %163 = vmatmul.bf16.gmra.mxu0 %v90
    %v164 = vpop.f32.mrf.mxu0
    %v165 = vadd.f32 0.0, %v164
    %v166 = vpop.f32.mrf.mxu0
    %v167 = vadd.f32 0.0, %v166
    %168 = vdwg.mxu0
    %v169 = vadd.f32 %v88, %v165
    %v170 = vadd.f32 %v89, %v167
    %171 = vst.msk [vmem:[#allocation2] sm:$0xff] %vm52, %v169
    %172 = vst.msk [vmem:[#allocation2 + $0x8] sm:$0xff] %vm52, %v170
    // Predicated region
    $region26: #{tpu_custom_call.1} parent=1 // pred_check
      %p173 = pneg %p22
    $region27: #{tpu_custom_call.1} parent=1 // pred_check_branch
      %175 = sbr.rel (%p173) target = $region29
    $region28: #{tpu_custom_call.1} parent=1 // pred_region
      %v176 = vld [vmem:[#allocation2] sm:$0xff]
      %v177 = vld [vmem:[#allocation2 + $0x8] sm:$0xff]
      %v178 = vld [vmem:[%s4] sm:$0x1]
      %v180 = vperm.slane %v178, 0
      %v182 = vadd.f32 %v176, %v180
      %v183 = vadd.f32 %v177, %v180
      %184 = vst.msk [vmem:[#allocation3] sm:$0xff] %vm52, %v182
      %185 = vst.msk [vmem:[#allocation3 + $0x8] sm:$0xff] %vm52, %v183
    $region29: #{tpu_custom_call.1} parent=1 // pred_fallthru
      _
    // Predicated region
    $region30: #{tpu_custom_call.1} parent=1 // pred_check
      _
    $region31: #{tpu_custom_call.1} parent=1 // pred_check_branch
      %187 = sbr.rel (0) target = $region33
    $region32: #{tpu_custom_call.1} parent=1 // pred_region
      %189 = vsyncadd [#allocation4], 0
      %s190 = sshll.u32 [#allocation3], 4
      %s191 = int_to_ptr.vmem [resolvable:$true] %s190
      %s192 = sshll.u32 %s5, 4
      %s193 = int_to_ptr.hbm [resolvable:$true] %s192
      %198 = dma.vmem_to_hbm [thread:$0]  %s191, 256, %s193, [#allocation4], 128, 128, 8
    $region33: #{tpu_custom_call.1} parent=1 // pred_fallthru
      _
    // Predicated region
    $region34: #{tpu_custom_call.1} parent=1 // pred_check
      _
    $region35: #{tpu_custom_call.1} parent=1 // pred_check_branch
      %200 = sbr.rel (0) target = $region37
    $region36: #{tpu_custom_call.1} parent=1 // pred_region
      %202 = dma.done [#allocation4], 256
    $region37: #{tpu_custom_call.1} parent=1 // pred_fallthru
      _
    %203 = vsyncpa [#allocation4], 1

</llo_original>
